<compile_context>
chip_gen: v5e
topology: v5e:2x2
jax: 0.10.0
libtpu: 0.0.40
codegen_flags: <defaults>
</compile_context>

<pallas_src>
import numpy as np
import jax
import jax.numpy as jnp
from jax.experimental import pallas as pl
from jax.experimental.pallas import tpu as pltpu

FILT_SIZE = 4
STRIDE = 2
PAD_OFF = 0


def _binomial_filter(filt_size):
    table = {1: [1.0], 2: [1.0, 1.0], 3: [1.0, 2.0, 1.0], 4: [1.0, 3.0, 3.0, 1.0],
             5: [1.0, 4.0, 6.0, 4.0, 1.0], 6: [1.0, 5.0, 10.0, 10.0, 5.0, 1.0],
             7: [1.0, 6.0, 15.0, 20.0, 15.0, 6.0, 1.0]}
    a = np.asarray(table[filt_size], np.float32)
    f = a[:, None] * a[None, :]
    return (f / f.sum()).astype(np.float32)


def _make_blurpool_kernel(Ho, Wo):
    # Separable per-axis taps: [1, 3, 3, 1] / 8  (outer product / 64 == filter).
    a = (0.125, 0.375, 0.375, 0.125)

    def kernel(x_ref, o_ref):
        # x_ref: (cb, 4, Ho+1, Wo+1) -- the 4 polyphase grids (index 2*p + q,
        #        p = H parity, q = W parity) of the reflection-padded input for
        #        a block of cb channel planes.
        # o_ref: (cb, Ho, Wo)
        hblur = []                                   # per H-parity horiz. blur
        for p in (0, 1):
            acc = None
            for q in (0, 1):
                ph = x_ref[:, 2 * p + q, :, :].astype(jnp.float32)
                t = a[q] * ph[:, :, :Wo] + a[2 + q] * ph[:, :, 1:Wo + 1]
                acc = t if acc is None else acc + t
            hblur.append(acc)                        # (cb, Ho+1, Wo)
        out = (a[0] * hblur[0][:, :Ho, :] + a[2] * hblur[0][:, 1:Ho + 1, :]) \
            + (a[1] * hblur[1][:, :Ho, :] + a[3] * hblur[1][:, 1:Ho + 1, :])
        o_ref[...] = out.astype(o_ref.dtype)

    return kernel


def blurpool(x_nchw, filt_size=FILT_SIZE, stride=STRIDE, pad_off=PAD_OFF):
    assert filt_size == 4 and stride == 2 and pad_off == 0

    N, C, H, W = x_nchw.shape
    pad_a = (filt_size - 1) // 2 + pad_off                      # 1
    pad_b = int(np.ceil((filt_size - 1) / 2.0)) + pad_off       # 2
    NC = N * C

    # NCHW kept throughout; N and C collapsed (free reshape, contiguous).
    x = x_nchw.reshape(NC, H, W)

    # ReflectionPad2d([left, right, top, bottom]) == numpy/jnp 'reflect' pad.
    xpad = jnp.pad(x, ((0, 0), (pad_a, pad_b), (pad_a, pad_b)), mode="reflect")
    Hp, Wp = H + pad_a + pad_b, W + pad_a + pad_b
    Ho = (Hp - filt_size) // stride + 1
    Wo = (Wp - filt_size) // stride + 1
    Hph, Wph = Ho + 1, Wo + 1

    # Polyphase decomposition (fuses with the pad in XLA); phase index 2*p + q.
    phases = jnp.stack(
        [xpad[:, p::2, q::2][:, :Hph, :Wph] for p in (0, 1) for q in (0, 1)],
        axis=1)                                      # (NC, 4, Hph, Wph)

    # Channel-plane block size: aim for <= ~4 MiB of input per block (well under
    # the 32 MiB scoped VMEM limit even double-buffered, incl. v7x's 64 MiB
    # physical VMEM), and a divisor of NC so every grid step is a full block.
    itemsize = np.dtype(phases.dtype).itemsize
    bytes_per_chan = 4 * Hph * Wph * itemsize + Ho * Wo * itemsize
    cb_target = int(max(1, min(NC, (4 << 20) // bytes_per_chan)))
    cb = 1
    for d in range(cb_target, 0, -1):
        if NC % d == 0:
            cb = d
            break

    out = pl.pallas_call(
        _make_blurpool_kernel(Ho, Wo),
        out_shape=jax.ShapeDtypeStruct((NC, Ho, Wo), x_nchw.dtype),
        grid=(NC // cb,),
        in_specs=[pl.BlockSpec((cb, 4, Hph, Wph), lambda i: (i, 0, 0, 0))],
        out_specs=pl.BlockSpec((cb, Ho, Wo), lambda i: (i, 0, 0)),
        compiler_params=pltpu.CompilerParams(
            dimension_semantics=("parallel",),
            vmem_limit_bytes=32 * 1024 * 1024),
    )(phases)

    return out.reshape(N, C, Ho, Wo)


def blurpool_ref_numpy(x_nchw):
    """Direct numpy reference of the PyTorch forward (filt_size=4, stride=2)."""
    x = np.asarray(x_nchw, np.float32)
    xp = np.pad(x, ((0, 0), (0, 0), (1, 2), (1, 2)), mode="reflect")
    filt = _binomial_filter(4)
    N, C, Hp, Wp = xp.shape
    Ho = (Hp - 4) // 2 + 1
    Wo = (Wp - 4) // 2 + 1
    out = np.zeros((N, C, Ho, Wo), np.float32)
    for ho in range(Ho):
        for wo in range(Wo):
            patch = xp[:, :, 2 * ho:2 * ho + 4, 2 * wo:2 * wo + 4]
            out[:, :, ho, wo] = np.sum(patch * filt[None, None], axis=(2, 3))
    return out


if __name__ == "__main__":
    key = jax.random.PRNGKey(0)
    x = jax.random.normal(key, (2, 4, 16, 16), dtype=jnp.float32)  # N,C,H,W

    blurpool_jit = jax.jit(blurpool)
    y = blurpool_jit(x)
    y = jax.block_until_ready(y)

    y_ref = blurpool_ref_numpy(np.asarray(x))
    assert y.shape == y_ref.shape == (2, 4, 8, 8)
    assert np.allclose(np.asarray(y), y_ref, rtol=1e-5, atol=1e-5)
    print("KERNEL_OK")
</pallas_src>

<mosaic_0001>
module attributes {stable_mosaic.version = 11 : i64} {
  func.func @kernel(%arg0: i32, %arg1: memref<8x4x9x9xf32, #tpu.memory_space<vmem>>, %arg2: memref<8x8x8xf32, #tpu.memory_space<vmem>>) attributes {dimension_semantics = [#tpu.dimension_semantics<parallel>], iteration_bounds = array<i64: 1>, scalar_prefetch = 0 : i64, scratch_operands = 0 : i64, tpu.core_type = #tpu.core_type<tc>, window_params = [{transform_indices = @transform_0, window_bounds = array<i64: 8, 4, 9, 9>}, {transform_indices = @transform_1, window_bounds = array<i64: 8, 8, 8>}]} {
    %c0 = arith.constant 0 : index
    %c0_0 = arith.constant 0 : index
    %c0_1 = arith.constant 0 : index
    %c0_2 = arith.constant 0 : index
    %0 = vector.load %arg1[%c0, %c0_0, %c0_1, %c0_2] : memref<8x4x9x9xf32, #tpu.memory_space<vmem>>, vector<8x1x9x9xf32>
    %1 = vector.shape_cast %0 : vector<8x1x9x9xf32> to vector<8x9x9xf32>
    %2 = vector.extract_strided_slice %1 {offsets = [0, 0, 0], sizes = [8, 9, 8], strides = [1, 1, 1]} : vector<8x9x9xf32> to vector<8x9x8xf32>
    %cst = arith.constant 1.250000e-01 : f32
    %3 = vector.broadcast %cst : f32 to vector<8x9x8xf32>
    %4 = arith.mulf %3, %2 : vector<8x9x8xf32>
    %5 = vector.extract_strided_slice %1 {offsets = [0, 0, 1], sizes = [8, 9, 8], strides = [1, 1, 1]} : vector<8x9x9xf32> to vector<8x9x8xf32>
    %cst_3 = arith.constant 3.750000e-01 : f32
    %6 = vector.broadcast %cst_3 : f32 to vector<8x9x8xf32>
    %7 = arith.mulf %6, %5 : vector<8x9x8xf32>
    %8 = arith.addf %4, %7 : vector<8x9x8xf32>
    %c0_4 = arith.constant 0 : index
    %c1 = arith.constant 1 : index
    %c0_5 = arith.constant 0 : index
    %c0_6 = arith.constant 0 : index
    %9 = vector.load %arg1[%c0_4, %c1, %c0_5, %c0_6] : memref<8x4x9x9xf32, #tpu.memory_space<vmem>>, vector<8x1x9x9xf32>
    %10 = vector.shape_cast %9 : vector<8x1x9x9xf32> to vector<8x9x9xf32>
    %11 = vector.extract_strided_slice %10 {offsets = [0, 0, 0], sizes = [8, 9, 8], strides = [1, 1, 1]} : vector<8x9x9xf32> to vector<8x9x8xf32>
    %cst_7 = arith.constant 3.750000e-01 : f32
    %12 = vector.broadcast %cst_7 : f32 to vector<8x9x8xf32>
    %13 = arith.mulf %12, %11 : vector<8x9x8xf32>
    %14 = vector.extract_strided_slice %10 {offsets = [0, 0, 1], sizes = [8, 9, 8], strides = [1, 1, 1]} : vector<8x9x9xf32> to vector<8x9x8xf32>
    %cst_8 = arith.constant 1.250000e-01 : f32
    %15 = vector.broadcast %cst_8 : f32 to vector<8x9x8xf32>
    %16 = arith.mulf %15, %14 : vector<8x9x8xf32>
    %17 = arith.addf %13, %16 : vector<8x9x8xf32>
    %18 = arith.addf %8, %17 : vector<8x9x8xf32>
    %c0_9 = arith.constant 0 : index
    %c2 = arith.constant 2 : index
    %c0_10 = arith.constant 0 : index
    %c0_11 = arith.constant 0 : index
    %19 = vector.load %arg1[%c0_9, %c2, %c0_10, %c0_11] : memref<8x4x9x9xf32, #tpu.memory_space<vmem>>, vector<8x1x9x9xf32>
    %20 = vector.shape_cast %19 : vector<8x1x9x9xf32> to vector<8x9x9xf32>
    %21 = vector.extract_strided_slice %20 {offsets = [0, 0, 0], sizes = [8, 9, 8], strides = [1, 1, 1]} : vector<8x9x9xf32> to vector<8x9x8xf32>
    %cst_12 = arith.constant 1.250000e-01 : f32
    %22 = vector.broadcast %cst_12 : f32 to vector<8x9x8xf32>
    %23 = arith.mulf %22, %21 : vector<8x9x8xf32>
    %24 = vector.extract_strided_slice %20 {offsets = [0, 0, 1], sizes = [8, 9, 8], strides = [1, 1, 1]} : vector<8x9x9xf32> to vector<8x9x8xf32>
    %cst_13 = arith.constant 3.750000e-01 : f32
    %25 = vector.broadcast %cst_13 : f32 to vector<8x9x8xf32>
    %26 = arith.mulf %25, %24 : vector<8x9x8xf32>
    %27 = arith.addf %23, %26 : vector<8x9x8xf32>
    %c0_14 = arith.constant 0 : index
    %c3 = arith.constant 3 : index
    %c0_15 = arith.constant 0 : index
    %c0_16 = arith.constant 0 : index
    %28 = vector.load %arg1[%c0_14, %c3, %c0_15, %c0_16] : memref<8x4x9x9xf32, #tpu.memory_space<vmem>>, vector<8x1x9x9xf32>
    %29 = vector.shape_cast %28 : vector<8x1x9x9xf32> to vector<8x9x9xf32>
    %30 = vector.extract_strided_slice %29 {offsets = [0, 0, 0], sizes = [8, 9, 8], strides = [1, 1, 1]} : vector<8x9x9xf32> to vector<8x9x8xf32>
    %cst_17 = arith.constant 3.750000e-01 : f32
    %31 = vector.broadcast %cst_17 : f32 to vector<8x9x8xf32>
    %32 = arith.mulf %31, %30 : vector<8x9x8xf32>
    %33 = vector.extract_strided_slice %29 {offsets = [0, 0, 1], sizes = [8, 9, 8], strides = [1, 1, 1]} : vector<8x9x9xf32> to vector<8x9x8xf32>
    %cst_18 = arith.constant 1.250000e-01 : f32
    %34 = vector.broadcast %cst_18 : f32 to vector<8x9x8xf32>
    %35 = arith.mulf %34, %33 : vector<8x9x8xf32>
    %36 = arith.addf %32, %35 : vector<8x9x8xf32>
    %37 = arith.addf %27, %36 : vector<8x9x8xf32>
    %38 = vector.extract_strided_slice %18 {offsets = [0, 0, 0], sizes = [8, 8, 8], strides = [1, 1, 1]} : vector<8x9x8xf32> to vector<8x8x8xf32>
    %cst_19 = arith.constant 1.250000e-01 : f32
    %39 = vector.broadcast %cst_19 : f32 to vector<8x8x8xf32>
    %40 = arith.mulf %39, %38 : vector<8x8x8xf32>
    %41 = vector.extract_strided_slice %18 {offsets = [0, 1, 0], sizes = [8, 8, 8], strides = [1, 1, 1]} : vector<8x9x8xf32> to vector<8x8x8xf32>
    %cst_20 = arith.constant 3.750000e-01 : f32
    %42 = vector.broadcast %cst_20 : f32 to vector<8x8x8xf32>
    %43 = arith.mulf %42, %41 : vector<8x8x8xf32>
    %44 = arith.addf %40, %43 : vector<8x8x8xf32>
    %45 = vector.extract_strided_slice %37 {offsets = [0, 0, 0], sizes = [8, 8, 8], strides = [1, 1, 1]} : vector<8x9x8xf32> to vector<8x8x8xf32>
    %cst_21 = arith.constant 3.750000e-01 : f32
    %46 = vector.broadcast %cst_21 : f32 to vector<8x8x8xf32>
    %47 = arith.mulf %46, %45 : vector<8x8x8xf32>
    %48 = vector.extract_strided_slice %37 {offsets = [0, 1, 0], sizes = [8, 8, 8], strides = [1, 1, 1]} : vector<8x9x8xf32> to vector<8x8x8xf32>
    %cst_22 = arith.constant 1.250000e-01 : f32
    %49 = vector.broadcast %cst_22 : f32 to vector<8x8x8xf32>
    %50 = arith.mulf %49, %48 : vector<8x8x8xf32>
    %51 = arith.addf %47, %50 : vector<8x8x8xf32>
    %52 = arith.addf %44, %51 : vector<8x8x8xf32>
    %c0_23 = arith.constant 0 : index
    %c0_24 = arith.constant 0 : index
    %c0_25 = arith.constant 0 : index
    %53 = vector.load %arg2[%c0_23, %c0_24, %c0_25] : memref<8x8x8xf32, #tpu.memory_space<vmem>>, vector<8x8x8xf32>
    tpu.vector_store %arg2[%c0_23, %c0_24, %c0_25], %52 {strides = array<i32>} : memref<8x8x8xf32, #tpu.memory_space<vmem>>, vector<8x8x8xf32>,
    return
  }
  func.func @transform_0(%arg0: i32) -> (i32, i32, i32, i32) {
    %c0_i32 = arith.constant 0 : i32
    %c0_i32_0 = arith.constant 0 : i32
    %c0_i32_1 = arith.constant 0 : i32
    %c0_i32_2 = arith.constant 0 : i32
    return %arg0, %c0_i32, %c0_i32_0, %c0_i32_1 : i32, i32, i32, i32
  }
  func.func @transform_1(%arg0: i32) -> (i32, i32, i32) {
    %c0_i32 = arith.constant 0 : i32
    %c0_i32_0 = arith.constant 0 : i32
    %c0_i32_1 = arith.constant 0 : i32
    return %arg0, %c0_i32, %c0_i32_0 : i32, i32, i32
  }
}

</mosaic_0001>

<llo_original>
// kernel: blurpool.1
$region0: #{blurpool.1}
  #allocation0 [shape = 'u32[]', space=smem, size = 0x4, offset = 0x4, fixed_abs, tag = 'smem constant byte address 0x4 - core index']
  #allocation1 [shape = 'u32[72,128]{1,0:T(1,128)}', space=vmem, size = 0x9000, scoped, tag = 'internal scratch']
  %s0 = inlined_call_operand.vmem [shape: f32[8,4,9,9], index: 0, kind: input, shape index: {}]
  %s1 = inlined_call_operand.hbm [shape: f32[8,8,8], index: 1, kind: output, shape index: {}]
  %s2 = sld [smem:[#allocation0]]
  $region14: #{blurpool.1} parent=0
    _
  %s4 = ssub.s32 1, %s2
  %s5 = scalar_select 0, %s4, %s2
  $region1: #{blurpool.1} parent=0
    #allocation2 [shape = 'u8[32768]{0}', space=vmem, size = 0x8000, scoped, tag = 'output window, operand 0, single buffered']
    #allocation3 [shape = 's32[1]{0}', space=sflag, size = 0x4, scoped, tag = 'scoped memory for blurpool.1']
    %6 = vsyncpa [#allocation3], 0
    // Predicated region
    $region2: #{blurpool.1} parent=1 // pred_check
      _
    $region3: #{blurpool.1} parent=1 // pred_check_branch
      %8 = sbr.rel (0) target = $region5
    $region4: #{blurpool.1} parent=1 // pred_region
      _
    $region5: #{blurpool.1} parent=1 // pred_fallthru
      _
    %v9 = vld [vmem:[%s0] sm:$0xff]
    %v10 = vld [vmem:[%s0 + $0x8] sm:$0x1]
    %v11 = vld [vmem:[%s0 + $0x40] sm:$0xff]
    %v12 = vld [vmem:[%s0 + $0x48] sm:$0x1]
    %v13 = vld [vmem:[%s0 + $0x80] sm:$0xff]
    %v14 = vld [vmem:[%s0 + $0x88] sm:$0x1]
    %v15 = vld [vmem:[%s0 + $0xc0] sm:$0xff]
    %v16 = vld [vmem:[%s0 + $0xc8] sm:$0x1]
    %v17 = vld [vmem:[%s0 + $0x100] sm:$0xff]
    %v18 = vld [vmem:[%s0 + $0x108] sm:$0x1]
    %v19 = vld [vmem:[%s0 + $0x140] sm:$0xff]
    %v20 = vld [vmem:[%s0 + $0x148] sm:$0x1]
    %v21 = vld [vmem:[%s0 + $0x180] sm:$0xff]
    %v22 = vld [vmem:[%s0 + $0x188] sm:$0x1]
    %v23 = vld [vmem:[%s0 + $0x1c0] sm:$0xff]
    %v24 = vld [vmem:[%s0 + $0x1c8] sm:$0x1]
    %v25 = vmul.f32 %v9, 0.125
    %v26 = vmul.f32 %v10, 0.125
    %v27 = vmul.f32 %v11, 0.125
    %v28 = vmul.f32 %v12, 0.125
    %v29 = vmul.f32 %v13, 0.125
    %v30 = vmul.f32 %v14, 0.125
    %v31 = vmul.f32 %v15, 0.125
    %v32 = vmul.f32 %v16, 0.125
    %v33 = vmul.f32 %v17, 0.125
    %v34 = vmul.f32 %v18, 0.125
    %v35 = vmul.f32 %v19, 0.125
    %v36 = vmul.f32 %v20, 0.125
    %v37 = vmul.f32 %v21, 0.125
    %v38 = vmul.f32 %v22, 0.125
    %v39 = vmul.f32 %v23, 0.125
    %v40 = vmul.f32 %v24, 0.125
    %v41 = vmul.f32 %v9, 0.375
    %v42 = vmul.f32 %v10, 0.375
    %v43 = vmul.f32 %v11, 0.375
    %v44 = vmul.f32 %v12, 0.375
    %v45 = vmul.f32 %v13, 0.375
    %v46 = vmul.f32 %v14, 0.375
    %v47 = vmul.f32 %v15, 0.375
    %v48 = vmul.f32 %v16, 0.375
    %v49 = vmul.f32 %v17, 0.375
    %v50 = vmul.f32 %v18, 0.375
    %v51 = vmul.f32 %v19, 0.375
    %v52 = vmul.f32 %v20, 0.375
    %v53 = vmul.f32 %v21, 0.375
    %v54 = vmul.f32 %v22, 0.375
    %v55 = vmul.f32 %v23, 0.375
    %v56 = vmul.f32 %v24, 0.375
    %73 = vrot.lane.b32.xlu0 %v41, 127
    %v74 = vpop.permute.xlu0 %73
    %75 = vrot.lane.b32.xlu0 %v42, 127
    %v76 = vpop.permute.xlu0 %75
    %77 = vrot.lane.b32.xlu0 %v43, 127
    %v78 = vpop.permute.xlu0 %77
    %79 = vrot.lane.b32.xlu0 %v44, 127
    %v80 = vpop.permute.xlu0 %79
    %81 = vrot.lane.b32.xlu0 %v45, 127
    %v82 = vpop.permute.xlu0 %81
    %83 = vrot.lane.b32.xlu0 %v46, 127
    %v84 = vpop.permute.xlu0 %83
    %85 = vrot.lane.b32.xlu0 %v47, 127
    %v86 = vpop.permute.xlu0 %85
    %87 = vrot.lane.b32.xlu0 %v48, 127
    %v88 = vpop.permute.xlu0 %87
    %89 = vrot.lane.b32.xlu0 %v49, 127
    %v90 = vpop.permute.xlu0 %89
    %91 = vrot.lane.b32.xlu0 %v50, 127
    %v92 = vpop.permute.xlu0 %91
    %93 = vrot.lane.b32.xlu0 %v51, 127
    %v94 = vpop.permute.xlu0 %93
    %95 = vrot.lane.b32.xlu0 %v52, 127
    %v96 = vpop.permute.xlu0 %95
    %97 = vrot.lane.b32.xlu0 %v53, 127
    %v98 = vpop.permute.xlu0 %97
    %99 = vrot.lane.b32.xlu0 %v54, 127
    %v100 = vpop.permute.xlu0 %99
    %101 = vrot.lane.b32.xlu0 %v55, 127
    %v102 = vpop.permute.xlu0 %101
    %103 = vrot.lane.b32.xlu0 %v56, 127
    %v104 = vpop.permute.xlu0 %103
    %v121 = vadd.f32 %v25, %v74
    %v122 = vadd.f32 %v26, %v76
    %v123 = vadd.f32 %v27, %v78
    %v124 = vadd.f32 %v28, %v80
    %v125 = vadd.f32 %v29, %v82
    %v126 = vadd.f32 %v30, %v84
    %v127 = vadd.f32 %v31, %v86
    %v128 = vadd.f32 %v32, %v88
    %v129 = vadd.f32 %v33, %v90
    %v130 = vadd.f32 %v34, %v92
    %v131 = vadd.f32 %v35, %v94
    %v132 = vadd.f32 %v36, %v96
    %v133 = vadd.f32 %v37, %v98
    %v134 = vadd.f32 %v38, %v100
    %v135 = vadd.f32 %v39, %v102
    %v136 = vadd.f32 %v40, %v104
    %s137 = scalar_lea.vmem %s0, 16
    %v138 = vld [vmem:[%s137] sm:$0xff]
    %v139 = vld [vmem:[%s137 + $0x8] sm:$0x1]
    %v140 = vld [vmem:[%s137 + $0x40] sm:$0xff]
    %v141 = vld [vmem:[%s137 + $0x48] sm:$0x1]
    %v142 = vld [vmem:[%s137 + $0x80] sm:$0xff]
    %v143 = vld [vmem:[%s137 + $0x88] sm:$0x1]
    %v144 = vld [vmem:[%s137 + $0xc0] sm:$0xff]
    %v145 = vld [vmem:[%s137 + $0xc8] sm:$0x1]
    %v146 = vld [vmem:[%s137 + $0x100] sm:$0xff]
    %v147 = vld [vmem:[%s137 + $0x108] sm:$0x1]
    %v148 = vld [vmem:[%s137 + $0x140] sm:$0xff]
    %v149 = vld [vmem:[%s137 + $0x148] sm:$0x1]
    %v150 = vld [vmem:[%s137 + $0x180] sm:$0xff]
    %v151 = vld [vmem:[%s137 + $0x188] sm:$0x1]
    %v152 = vld [vmem:[%s137 + $0x1c0] sm:$0xff]
    %v153 = vld [vmem:[%s137 + $0x1c8] sm:$0x1]
    %v154 = vmul.f32 %v138, 0.375
    %v155 = vmul.f32 %v139, 0.375
    %v156 = vmul.f32 %v140, 0.375
    %v157 = vmul.f32 %v141, 0.375
    %v158 = vmul.f32 %v142, 0.375
    %v159 = vmul.f32 %v143, 0.375
    %v160 = vmul.f32 %v144, 0.375
    %v161 = vmul.f32 %v145, 0.375
    %v162 = vmul.f32 %v146, 0.375
    %v163 = vmul.f32 %v147, 0.375
    %v164 = vmul.f32 %v148, 0.375
    %v165 = vmul.f32 %v149, 0.375
    %v166 = vmul.f32 %v150, 0.375
    %v167 = vmul.f32 %v151, 0.375
    %v168 = vmul.f32 %v152, 0.375
    %v169 = vmul.f32 %v153, 0.375
    %v170 = vmul.f32 %v138, 0.125
    %v171 = vmul.f32 %v139, 0.125
    %v172 = vmul.f32 %v140, 0.125
    %v173 = vmul.f32 %v141, 0.125
    %v174 = vmul.f32 %v142, 0.125
    %v175 = vmul.f32 %v143, 0.125
    %v176 = vmul.f32 %v144, 0.125
    %v177 = vmul.f32 %v145, 0.125
    %v178 = vmul.f32 %v146, 0.125
    %v179 = vmul.f32 %v147, 0.125
    %v180 = vmul.f32 %v148, 0.125
    %v181 = vmul.f32 %v149, 0.125
    %v182 = vmul.f32 %v150, 0.125
    %v183 = vmul.f32 %v151, 0.125
    %v184 = vmul.f32 %v152, 0.125
    %v185 = vmul.f32 %v153, 0.125
    %202 = vrot.lane.b32.xlu0 %v170, 127
    %v203 = vpop.permute.xlu0 %202
    %204 = vrot.lane.b32.xlu0 %v171, 127
    %v205 = vpop.permute.xlu0 %204
    %206 = vrot.lane.b32.xlu0 %v172, 127
    %v207 = vpop.permute.xlu0 %206
    %208 = vrot.lane.b32.xlu0 %v173, 127
    %v209 = vpop.permute.xlu0 %208
    %210 = vrot.lane.b32.xlu0 %v174, 127
    %v211 = vpop.permute.xlu0 %210
    %212 = vrot.lane.b32.xlu0 %v175, 127
    %v213 = vpop.permute.xlu0 %212
    %214 = vrot.lane.b32.xlu0 %v176, 127
    %v215 = vpop.permute.xlu0 %214
    %216 = vrot.lane.b32.xlu0 %v177, 127
    %v217 = vpop.permute.xlu0 %216
    %218 = vrot.lane.b32.xlu0 %v178, 127
    %v219 = vpop.permute.xlu0 %218
    %220 = vrot.lane.b32.xlu0 %v179, 127
    %v221 = vpop.permute.xlu0 %220
    %222 = vrot.lane.b32.xlu0 %v180, 127
    %v223 = vpop.permute.xlu0 %222
    %224 = vrot.lane.b32.xlu0 %v181, 127
    %v225 = vpop.permute.xlu0 %224
    %226 = vrot.lane.b32.xlu0 %v182, 127
    %v227 = vpop.permute.xlu0 %226
    %228 = vrot.lane.b32.xlu0 %v183, 127
    %v229 = vpop.permute.xlu0 %228
    %230 = vrot.lane.b32.xlu0 %v184, 127
    %v231 = vpop.permute.xlu0 %230
    %232 = vrot.lane.b32.xlu0 %v185, 127
    %v233 = vpop.permute.xlu0 %232
    %v250 = vadd.f32 %v154, %v203
    %v251 = vadd.f32 %v155, %v205
    %v252 = vadd.f32 %v156, %v207
    %v253 = vadd.f32 %v157, %v209
    %v254 = vadd.f32 %v158, %v211
    %v255 = vadd.f32 %v159, %v213
    %v256 = vadd.f32 %v160, %v215
    %v257 = vadd.f32 %v161, %v217
    %v258 = vadd.f32 %v162, %v219
    %v259 = vadd.f32 %v163, %v221
    %v260 = vadd.f32 %v164, %v223
    %v261 = vadd.f32 %v165, %v225
    %v262 = vadd.f32 %v166, %v227
    %v263 = vadd.f32 %v167, %v229
    %v264 = vadd.f32 %v168, %v231
    %v265 = vadd.f32 %v169, %v233
    %v266 = vadd.f32 %v121, %v250
    %v267 = vadd.f32 %v122, %v251
    %v268 = vadd.f32 %v123, %v252
    %v269 = vadd.f32 %v124, %v253
    %v270 = vadd.f32 %v125, %v254
    %v271 = vadd.f32 %v126, %v255
    %v272 = vadd.f32 %v127, %v256
    %v273 = vadd.f32 %v128, %v257
    %v274 = vadd.f32 %v129, %v258
    %v275 = vadd.f32 %v130, %v259
    %v276 = vadd.f32 %v131, %v260
    %v277 = vadd.f32 %v132, %v261
    %v278 = vadd.f32 %v133, %v262
    %v279 = vadd.f32 %v134, %v263
    %v280 = vadd.f32 %v135, %v264
    %v281 = vadd.f32 %v136, %v265
    %s282 = scalar_lea.vmem %s0, 32
    %v283 = vld [vmem:[%s282] sm:$0xff]
    %v284 = vld [vmem:[%s282 + $0x8] sm:$0x1]
    %v285 = vld [vmem:[%s282 + $0x40] sm:$0xff]
    %v286 = vld [vmem:[%s282 + $0x48] sm:$0x1]
    %v287 = vld [vmem:[%s282 + $0x80] sm:$0xff]
    %v288 = vld [vmem:[%s282 + $0x88] sm:$0x1]
    %v289 = vld [vmem:[%s282 + $0xc0] sm:$0xff]
    %v290 = vld [vmem:[%s282 + $0xc8] sm:$0x1]
    %v291 = vld [vmem:[%s282 + $0x100] sm:$0xff]
    %v292 = vld [vmem:[%s282 + $0x108] sm:$0x1]
    %v293 = vld [vmem:[%s282 + $0x140] sm:$0xff]
    %v294 = vld [vmem:[%s282 + $0x148] sm:$0x1]
    %v295 = vld [vmem:[%s282 + $0x180] sm:$0xff]
    %v296 = vld [vmem:[%s282 + $0x188] sm:$0x1]
    %v297 = vld [vmem:[%s282 + $0x1c0] sm:$0xff]
    %v298 = vld [vmem:[%s282 + $0x1c8] sm:$0x1]
    %v299 = vmul.f32 %v283, 0.125
    %v300 = vmul.f32 %v284, 0.125
    %v301 = vmul.f32 %v285, 0.125
    %v302 = vmul.f32 %v286, 0.125
    %v303 = vmul.f32 %v287, 0.125
    %v304 = vmul.f32 %v288, 0.125
    %v305 = vmul.f32 %v289, 0.125
    %v306 = vmul.f32 %v290, 0.125
    %v307 = vmul.f32 %v291, 0.125
    %v308 = vmul.f32 %v292, 0.125
    %v309 = vmul.f32 %v293, 0.125
    %v310 = vmul.f32 %v294, 0.125
    %v311 = vmul.f32 %v295, 0.125
    %v312 = vmul.f32 %v296, 0.125
    %v313 = vmul.f32 %v297, 0.125
    %v314 = vmul.f32 %v298, 0.125
    %v315 = vmul.f32 %v283, 0.375
    %v316 = vmul.f32 %v284, 0.375
    %v317 = vmul.f32 %v285, 0.375
    %v318 = vmul.f32 %v286, 0.375
    %v319 = vmul.f32 %v287, 0.375
    %v320 = vmul.f32 %v288, 0.375
    %v321 = vmul.f32 %v289, 0.375
    %v322 = vmul.f32 %v290, 0.375
    %v323 = vmul.f32 %v291, 0.375
    %v324 = vmul.f32 %v292, 0.375
    %v325 = vmul.f32 %v293, 0.375
    %v326 = vmul.f32 %v294, 0.375
    %v327 = vmul.f32 %v295, 0.375
    %v328 = vmul.f32 %v296, 0.375
    %v329 = vmul.f32 %v297, 0.375
    %v330 = vmul.f32 %v298, 0.375
    %347 = vrot.lane.b32.xlu0 %v315, 127
    %v348 = vpop.permute.xlu0 %347
    %349 = vrot.lane.b32.xlu0 %v316, 127
    %v350 = vpop.permute.xlu0 %349
    %351 = vrot.lane.b32.xlu0 %v317, 127
    %v352 = vpop.permute.xlu0 %351
    %353 = vrot.lane.b32.xlu0 %v318, 127
    %v354 = vpop.permute.xlu0 %353
    %355 = vrot.lane.b32.xlu0 %v319, 127
    %v356 = vpop.permute.xlu0 %355
    %357 = vrot.lane.b32.xlu0 %v320, 127
    %v358 = vpop.permute.xlu0 %357
    %359 = vrot.lane.b32.xlu0 %v321, 127
    %v360 = vpop.permute.xlu0 %359
    %361 = vrot.lane.b32.xlu0 %v322, 127
    %v362 = vpop.permute.xlu0 %361
    %363 = vrot.lane.b32.xlu0 %v323, 127
    %v364 = vpop.permute.xlu0 %363
    %365 = vrot.lane.b32.xlu0 %v324, 127
    %v366 = vpop.permute.xlu0 %365
    %367 = vrot.lane.b32.xlu0 %v325, 127
    %v368 = vpop.permute.xlu0 %367
    %369 = vrot.lane.b32.xlu0 %v326, 127
    %v370 = vpop.permute.xlu0 %369
    %371 = vrot.lane.b32.xlu0 %v327, 127
    %v372 = vpop.permute.xlu0 %371
    %373 = vrot.lane.b32.xlu0 %v328, 127
    %v374 = vpop.permute.xlu0 %373
    %375 = vrot.lane.b32.xlu0 %v329, 127
    %v376 = vpop.permute.xlu0 %375
    %377 = vrot.lane.b32.xlu0 %v330, 127
    %v378 = vpop.permute.xlu0 %377
    %v395 = vadd.f32 %v299, %v348
    %v396 = vadd.f32 %v300, %v350
    %v397 = vadd.f32 %v301, %v352
    %v398 = vadd.f32 %v302, %v354
    %v399 = vadd.f32 %v303, %v356
    %v400 = vadd.f32 %v304, %v358
    %v401 = vadd.f32 %v305, %v360
    %v402 = vadd.f32 %v306, %v362
    %v403 = vadd.f32 %v307, %v364
    %v404 = vadd.f32 %v308, %v366
    %v405 = vadd.f32 %v309, %v368
    %v406 = vadd.f32 %v310, %v370
    %v407 = vadd.f32 %v311, %v372
    %v408 = vadd.f32 %v312, %v374
    %v409 = vadd.f32 %v313, %v376
    %v410 = vadd.f32 %v314, %v378
    %s411 = scalar_lea.vmem %s0, 48
    %v412 = vld [vmem:[%s411] sm:$0xff]
    %v413 = vld [vmem:[%s411 + $0x8] sm:$0x1]
    %v414 = vld [vmem:[%s411 + $0x40] sm:$0xff]
    %v415 = vld [vmem:[%s411 + $0x48] sm:$0x1]
    %v416 = vld [vmem:[%s411 + $0x80] sm:$0xff]
    %v417 = vld [vmem:[%s411 + $0x88] sm:$0x1]
    %v418 = vld [vmem:[%s411 + $0xc0] sm:$0xff]
    %v419 = vld [vmem:[%s411 + $0xc8] sm:$0x1]
    %v420 = vld [vmem:[%s411 + $0x100] sm:$0xff]
    %v421 = vld [vmem:[%s411 + $0x108] sm:$0x1]
    %v422 = vld [vmem:[%s411 + $0x140] sm:$0xff]
    %v423 = vld [vmem:[%s411 + $0x148] sm:$0x1]
    %v424 = vld [vmem:[%s411 + $0x180] sm:$0xff]
    %v425 = vld [vmem:[%s411 + $0x188] sm:$0x1]
    %v426 = vld [vmem:[%s411 + $0x1c0] sm:$0xff]
    %v427 = vld [vmem:[%s411 + $0x1c8] sm:$0x1]
    %v428 = vmul.f32 %v412, 0.375
    %v429 = vmul.f32 %v413, 0.375
    %v430 = vmul.f32 %v414, 0.375
    %v431 = vmul.f32 %v415, 0.375
    %v432 = vmul.f32 %v416, 0.375
    %v433 = vmul.f32 %v417, 0.375
    %v434 = vmul.f32 %v418, 0.375
    %v435 = vmul.f32 %v419, 0.375
    %v436 = vmul.f32 %v420, 0.375
    %v437 = vmul.f32 %v421, 0.375
    %v438 = vmul.f32 %v422, 0.375
    %v439 = vmul.f32 %v423, 0.375
    %v440 = vmul.f32 %v424, 0.375
    %v441 = vmul.f32 %v425, 0.375
    %v442 = vmul.f32 %v426, 0.375
    %v443 = vmul.f32 %v427, 0.375
    %v444 = vmul.f32 %v412, 0.125
    %v445 = vmul.f32 %v413, 0.125
    %v446 = vmul.f32 %v414, 0.125
    %v447 = vmul.f32 %v415, 0.125
    %v448 = vmul.f32 %v416, 0.125
    %v449 = vmul.f32 %v417, 0.125
    %v450 = vmul.f32 %v418, 0.125
    %v451 = vmul.f32 %v419, 0.125
    %v452 = vmul.f32 %v420, 0.125
    %v453 = vmul.f32 %v421, 0.125
    %v454 = vmul.f32 %v422, 0.125
    %v455 = vmul.f32 %v423, 0.125
    %v456 = vmul.f32 %v424, 0.125
    %v457 = vmul.f32 %v425, 0.125
    %v458 = vmul.f32 %v426, 0.125
    %v459 = vmul.f32 %v427, 0.125
    %476 = vrot.lane.b32.xlu0 %v444, 127
    %v477 = vpop.permute.xlu0 %476
    %478 = vrot.lane.b32.xlu0 %v445, 127
    %v479 = vpop.permute.xlu0 %478
    %480 = vrot.lane.b32.xlu0 %v446, 127
    %v481 = vpop.permute.xlu0 %480
    %482 = vrot.lane.b32.xlu0 %v447, 127
    %v483 = vpop.permute.xlu0 %482
    %484 = vrot.lane.b32.xlu0 %v448, 127
    %v485 = vpop.permute.xlu0 %484
    %486 = vrot.lane.b32.xlu0 %v449, 127
    %v487 = vpop.permute.xlu0 %486
    %488 = vrot.lane.b32.xlu0 %v450, 127
    %v489 = vpop.permute.xlu0 %488
    %490 = vrot.lane.b32.xlu0 %v451, 127
    %v491 = vpop.permute.xlu0 %490
    %492 = vrot.lane.b32.xlu0 %v452, 127
    %v493 = vpop.permute.xlu0 %492
    %494 = vrot.lane.b32.xlu0 %v453, 127
    %v495 = vpop.permute.xlu0 %494
    %496 = vrot.lane.b32.xlu0 %v454, 127
    %v497 = vpop.permute.xlu0 %496
    %498 = vrot.lane.b32.xlu0 %v455, 127
    %v499 = vpop.permute.xlu0 %498
    %500 = vrot.lane.b32.xlu0 %v456, 127
    %v501 = vpop.permute.xlu0 %500
    %502 = vrot.lane.b32.xlu0 %v457, 127
    %v503 = vpop.permute.xlu0 %502
    %504 = vrot.lane.b32.xlu0 %v458, 127
    %v505 = vpop.permute.xlu0 %504
    %506 = vrot.lane.b32.xlu0 %v459, 127
    %v507 = vpop.permute.xlu0 %506
    %v524 = vadd.f32 %v428, %v477
    %v525 = vadd.f32 %v429, %v479
    %v526 = vadd.f32 %v430, %v481
    %v527 = vadd.f32 %v431, %v483
    %v528 = vadd.f32 %v432, %v485
    %v529 = vadd.f32 %v433, %v487
    %v530 = vadd.f32 %v434, %v489
    %v531 = vadd.f32 %v435, %v491
    %v532 = vadd.f32 %v436, %v493
    %v533 = vadd.f32 %v437, %v495
    %v534 = vadd.f32 %v438, %v497
    %v535 = vadd.f32 %v439, %v499
    %v536 = vadd.f32 %v440, %v501
    %v537 = vadd.f32 %v441, %v503
    %v538 = vadd.f32 %v442, %v505
    %v539 = vadd.f32 %v443, %v507
    %v540 = vadd.f32 %v395, %v524
    %v541 = vadd.f32 %v396, %v525
    %v542 = vadd.f32 %v397, %v526
    %v543 = vadd.f32 %v398, %v527
    %v544 = vadd.f32 %v399, %v528
    %v545 = vadd.f32 %v400, %v529
    %v546 = vadd.f32 %v401, %v530
    %v547 = vadd.f32 %v402, %v531
    %v548 = vadd.f32 %v403, %v532
    %v549 = vadd.f32 %v404, %v533
    %v550 = vadd.f32 %v405, %v534
    %v551 = vadd.f32 %v406, %v535
    %v552 = vadd.f32 %v407, %v536
    %v553 = vadd.f32 %v408, %v537
    %v554 = vadd.f32 %v409, %v538
    %v555 = vadd.f32 %v410, %v539
    %v556 = vmul.f32 %v266, 0.125
    %v557 = vmul.f32 %v268, 0.125
    %v558 = vmul.f32 %v270, 0.125
    %v559 = vmul.f32 %v272, 0.125
    %v560 = vmul.f32 %v274, 0.125
    %v561 = vmul.f32 %v276, 0.125
    %v562 = vmul.f32 %v278, 0.125
    %v563 = vmul.f32 %v280, 0.125
    %v564 = vmul.f32 %v266, 0.375
    %v565 = vmul.f32 %v267, 0.375
    %v566 = vmul.f32 %v268, 0.375
    %v567 = vmul.f32 %v269, 0.375
    %v568 = vmul.f32 %v270, 0.375
    %v569 = vmul.f32 %v271, 0.375
    %v570 = vmul.f32 %v272, 0.375
    %v571 = vmul.f32 %v273, 0.375
    %v572 = vmul.f32 %v274, 0.375
    %v573 = vmul.f32 %v275, 0.375
    %v574 = vmul.f32 %v276, 0.375
    %v575 = vmul.f32 %v277, 0.375
    %v576 = vmul.f32 %v278, 0.375
    %v577 = vmul.f32 %v279, 0.375
    %v578 = vmul.f32 %v280, 0.375
    %v579 = vmul.f32 %v281, 0.375
    %vm596 = vcmask 1046528
    %v597 = vrot.slane %v564, 1
    %v598 = vrot.slane %v565, 1
    %v599 = vsel %vm596, %v597, %v598
    %v600 = vrot.slane %v566, 1
    %v601 = vrot.slane %v567, 1
    %v602 = vsel %vm596, %v600, %v601
    %v603 = vrot.slane %v568, 1
    %v604 = vrot.slane %v569, 1
    %v605 = vsel %vm596, %v603, %v604
    %v606 = vrot.slane %v570, 1
    %v607 = vrot.slane %v571, 1
    %v608 = vsel %vm596, %v606, %v607
    %v609 = vrot.slane %v572, 1
    %v610 = vrot.slane %v573, 1
    %v611 = vsel %vm596, %v609, %v610
    %v612 = vrot.slane %v574, 1
    %v613 = vrot.slane %v575, 1
    %v614 = vsel %vm596, %v612, %v613
    %v615 = vrot.slane %v576, 1
    %v616 = vrot.slane %v577, 1
    %v617 = vsel %vm596, %v615, %v616
    %v618 = vrot.slane %v578, 1
    %v619 = vrot.slane %v579, 1
    %v620 = vsel %vm596, %v618, %v619
    %v629 = vadd.f32 %v556, %v599
    %v630 = vadd.f32 %v557, %v602
    %v631 = vadd.f32 %v558, %v605
    %v632 = vadd.f32 %v559, %v608
    %v633 = vadd.f32 %v560, %v611
    %v634 = vadd.f32 %v561, %v614
    %v635 = vadd.f32 %v562, %v617
    %v636 = vadd.f32 %v563, %v620
    %v637 = vmul.f32 %v540, 0.375
    %v638 = vmul.f32 %v542, 0.375
    %v639 = vmul.f32 %v544, 0.375
    %v640 = vmul.f32 %v546, 0.375
    %v641 = vmul.f32 %v548, 0.375
    %v642 = vmul.f32 %v550, 0.375
    %v643 = vmul.f32 %v552, 0.375
    %v644 = vmul.f32 %v554, 0.375
    %v645 = vmul.f32 %v540, 0.125
    %v646 = vmul.f32 %v541, 0.125
    %v647 = vmul.f32 %v542, 0.125
    %v648 = vmul.f32 %v543, 0.125
    %v649 = vmul.f32 %v544, 0.125
    %v650 = vmul.f32 %v545, 0.125
    %v651 = vmul.f32 %v546, 0.125
    %v652 = vmul.f32 %v547, 0.125
    %v653 = vmul.f32 %v548, 0.125
    %v654 = vmul.f32 %v549, 0.125
    %v655 = vmul.f32 %v550, 0.125
    %v656 = vmul.f32 %v551, 0.125
    %v657 = vmul.f32 %v552, 0.125
    %v658 = vmul.f32 %v553, 0.125
    %v659 = vmul.f32 %v554, 0.125
    %v660 = vmul.f32 %v555, 0.125
    %v677 = vrot.slane %v645, 1
    %v678 = vrot.slane %v646, 1
    %v679 = vsel %vm596, %v677, %v678
    %v680 = vrot.slane %v647, 1
    %v681 = vrot.slane %v648, 1
    %v682 = vsel %vm596, %v680, %v681
    %v683 = vrot.slane %v649, 1
    %v684 = vrot.slane %v650, 1
    %v685 = vsel %vm596, %v683, %v684
    %v686 = vrot.slane %v651, 1
    %v687 = vrot.slane %v652, 1
    %v688 = vsel %vm596, %v686, %v687
    %v689 = vrot.slane %v653, 1
    %v690 = vrot.slane %v654, 1
    %v691 = vsel %vm596, %v689, %v690
    %v692 = vrot.slane %v655, 1
    %v693 = vrot.slane %v656, 1
    %v694 = vsel %vm596, %v692, %v693
    %v695 = vrot.slane %v657, 1
    %v696 = vrot.slane %v658, 1
    %v697 = vsel %vm596, %v695, %v696
    %v698 = vrot.slane %v659, 1
    %v699 = vrot.slane %v660, 1
    %v700 = vsel %vm596, %v698, %v699
    %v709 = vadd.f32 %v637, %v679
    %v710 = vadd.f32 %v638, %v682
    %v711 = vadd.f32 %v639, %v685
    %v712 = vadd.f32 %v640, %v688
    %v713 = vadd.f32 %v641, %v691
    %v714 = vadd.f32 %v642, %v694
    %v715 = vadd.f32 %v643, %v697
    %v716 = vadd.f32 %v644, %v700
    %v717 = vadd.f32 %v629, %v709
    %v718 = vadd.f32 %v630, %v710
    %v719 = vadd.f32 %v631, %v711
    %v720 = vadd.f32 %v632, %v712
    %v721 = vadd.f32 %v633, %v713
    %v722 = vadd.f32 %v634, %v714
    %v723 = vadd.f32 %v635, %v715
    %v724 = vadd.f32 %v636, %v716
    %vm725 = vcmask 64512
    %726 = vst.msk [vmem:[#allocation2] sm:$0xff] %vm725, %v717
    %727 = vst.msk [vmem:[#allocation2 + $0x8] sm:$0xff] %vm725, %v718
    %728 = vst.msk [vmem:[#allocation2 + $0x10] sm:$0xff] %vm725, %v719
    %729 = vst.msk [vmem:[#allocation2 + $0x18] sm:$0xff] %vm725, %v720
    %730 = vst.msk [vmem:[#allocation2 + $0x20] sm:$0xff] %vm725, %v721
    %731 = vst.msk [vmem:[#allocation2 + $0x28] sm:$0xff] %vm725, %v722
    %732 = vst.msk [vmem:[#allocation2 + $0x30] sm:$0xff] %vm725, %v723
    %733 = vst.msk [vmem:[#allocation2 + $0x38] sm:$0xff] %vm725, %v724
    // Predicated region
    $region6: #{blurpool.1} parent=1 // pred_check
      _
    $region7: #{blurpool.1} parent=1 // pred_check_branch
      %735 = sbr.rel (0) target = $region9
    $region8: #{blurpool.1} parent=1 // pred_region
      %737 = vsyncadd [#allocation3], 0
      %s738 = sshll.u32 [#allocation2], 4
      %s739 = int_to_ptr.vmem [resolvable:$true] %s738
      %s740 = sshll.u32 %s1, 4
      %s741 = int_to_ptr.hbm [resolvable:$true] %s740
      %746 = dma.vmem_to_hbm [thread:$0]  %s739, 1024, %s741, [#allocation3], 128, 128, 8
    $region9: #{blurpool.1} parent=1 // pred_fallthru
      _
    // Predicated region
    $region10: #{blurpool.1} parent=1 // pred_check
      _
    $region11: #{blurpool.1} parent=1 // pred_check_branch
      %748 = sbr.rel (0) target = $region13
    $region12: #{blurpool.1} parent=1 // pred_region
      %750 = dma.done [#allocation3], 1024
    $region13: #{blurpool.1} parent=1 // pred_fallthru
      _
    %751 = vsyncpa [#allocation3], 1

</llo_original>
